<compile_context>
chip_gen: v7x
topology: tpu7x:2x2x1
jax: 0.10.0
libtpu: 0.0.40
codegen_flags: <defaults>
</compile_context>

<pallas_src>
import math

import jax
import jax.numpy as jnp
from jax.experimental import pallas as pl
from jax.experimental.pallas import tpu as pltpu


def _round_up(x, m):
    return ((x + m - 1) // m) * m


def _pick_batch_tile(batch, max_tile):
    """Batch (lane) tile size.

    - >= 2 grid steps whenever batch >= 256 so the "parallel" grid axis can be
      sharded across v7x's two TensorCores,
    - tiles are multiples of 128 lanes (dense, unmasked output stores),
    - capped at `max_tile` so the per-step VMEM footprint (double-buffered x
      window + the (H_pad, TB) f32 hidden temporary) stays well inside v7x's
      64 MiB physical VMEM while still amortising the ~0.35 us per-step cost.
    """
    if batch < 256:
        return batch                              # single full-extent block
    tile = _round_up((batch + 1) // 2, 128)       # ~batch/2 -> at least 2 steps
    return min(tile, max_tile)


def net_kernel(x_ref, w1_ref, b1_ref, w2_ref, b2_ref, o_ref):
    """One batch tile of the fused MLP forward.

    x_ref:  (TB, D_in)   activations, natural row-major layout (no host transpose)
    w1_ref: (H_pad, D_in) fc1 weight (torch layout); rows >= hidden_size are zero
    b1_ref: (H_pad, 1)    fc1 bias column
    w2_ref: (8, H_pad)    fc2 weight in row 0, rows 1..7 zero (NN MXU matmul, M=8)
    b2_ref: (1, 1)        fc2 bias scalar, SMEM
    o_ref:  (1, TB)       lane-dense output row (batch on lanes)
    """
    # fc1 on the MXU, NT form: contract the feature axis of both operands.
    #   (H_pad, D_in) x (TB, D_in)^T -> (H_pad, TB); batch stays on lanes.
    h = jax.lax.dot_general(
        w1_ref[...], x_ref[...],
        (((1,), (1,)), ((), ())),
        preferred_element_type=jnp.float32)
    h = jnp.maximum(h + b1_ref[...], 0.0)

    # fc2 also on the MXU (the VALU is the busy slot; the MXU is nearly idle):
    #   (8, H_pad) @ (H_pad, TB) -> (8, TB); only row 0 carries the real output.
    o = jax.lax.dot_general(
        w2_ref[...], h,
        (((1,), (0,)), ((), ())),
        preferred_element_type=jnp.float32)
    o_ref[...] = jnp.maximum(o[0:1, :] + b2_ref[0, 0], 0.0).astype(o_ref.dtype)


def net_forward(x, w1, b1, w2, b2, *, fc1_dtype=None, max_batch_tile=8192):
    """Fused Net.forward.

    x:  (B, D_in) f32   w1: (H_pad, D_in)   b1: (H_pad, 1)
    w2: (8, H_pad)      b2: (1, 1)
    Returns (B, 1) f32, matching the PyTorch module.

    fc1_dtype=jnp.bfloat16 (optional, v6e/v7x) halves x's HBM bytes and the
    fc1 MXU input width; accumulation stays f32.  Default None keeps everything
    f32 (bit-tight vs. the reference).
    """
    B, d_in = x.shape
    h_pad = w1.shape[0]
    assert w1.shape == (h_pad, d_in)
    assert b1.shape == (h_pad, 1)
    assert w2.shape == (8, h_pad)
    assert b2.shape == (1, 1)

    if fc1_dtype is not None and fc1_dtype != x.dtype:
        x = x.astype(fc1_dtype)
        w1 = w1.astype(fc1_dtype)

    tb = _pick_batch_tile(B, max_batch_tile)
    grid = (pl.cdiv(B, tb),)          # ragged tail handled by Pallas masking

    out = pl.pallas_call(
        net_kernel,
        out_shape=jax.ShapeDtypeStruct((1, B), jnp.float32),
        grid=grid,
        in_specs=[
            # activations: batch-tiled, contiguous row-major DMA, double-buffered
            pl.BlockSpec((tb, d_in), lambda i: (i, 0)),
            # small resident parameter blocks (constant index maps)
            pl.BlockSpec((h_pad, d_in), lambda i: (0, 0)),
            pl.BlockSpec((h_pad, 1), lambda i: (0, 0)),
            pl.BlockSpec((8, h_pad), lambda i: (0, 0)),
            # fc2 scalar bias lives in SMEM
            pl.BlockSpec(memory_space=pltpu.MemorySpace.SMEM),
        ],
        out_specs=pl.BlockSpec((1, tb), lambda i: (0, i)),
        compiler_params=pltpu.CompilerParams(
            dimension_semantics=("parallel",),     # v7x: shard batch over 2 TCs
            vmem_limit_bytes=40 * 1024 * 1024,     # headroom under v7x's 64 MiB
        ),
    )(x, w1, b1, w2, b2)

    return out.reshape(B, 1)                        # torch-compatible (B, 1)


def init_params(key, input_size, hidden_size):
    """torch.nn.Linear-style init (U(+-1/sqrt(fan_in))), padded for the kernel.

    H_pad = hidden_size rounded up to a multiple of 8 (sublane alignment only;
    the hidden axis never touches the 128-lane dim), so 100 -> 104.  All padded
    rows/columns are zero, which makes the padding a numerical no-op.
    """
    h_pad = _round_up(hidden_size, 8)
    k1, k2, k3, k4 = jax.random.split(key, 4)
    bound1 = 1.0 / math.sqrt(input_size)
    bound2 = 1.0 / math.sqrt(hidden_size)

    w1 = jnp.zeros((h_pad, input_size), jnp.float32).at[:hidden_size].set(
        jax.random.uniform(k1, (hidden_size, input_size), jnp.float32,
                           -bound1, bound1))
    b1 = jnp.zeros((h_pad, 1), jnp.float32).at[:hidden_size, 0].set(
        jax.random.uniform(k2, (hidden_size,), jnp.float32, -bound1, bound1))
    w2 = jnp.zeros((8, h_pad), jnp.float32).at[0, :hidden_size].set(
        jax.random.uniform(k3, (hidden_size,), jnp.float32, -bound2, bound2))
    b2 = jax.random.uniform(k4, (1, 1), jnp.float32, -bound2, bound2)
    return w1, b1, w2, b2


if __name__ == "__main__":
    batch = 850          # the reference script trains on x[:850]
    input_size = 8       # small feature count, as the Yahoo-finance slice implies
    hidden_size = 100

    key = jax.random.PRNGKey(0)
    kx, kp = jax.random.split(key)
    x = jax.random.uniform(kx, (batch, input_size), jnp.float32)  # data in [0, 1]
    w1, b1, w2, b2 = init_params(kp, input_size, hidden_size)

    # batch=850 -> tile=512 -> 2 grid steps (second one ragged): exercises the
    # multi-block parallel grid and the masked final block.
    out = jax.block_until_ready(jax.jit(net_forward)(x, w1, b1, w2, b2))

    # Pure-JAX reference of the same forward pass (unpadded parameters).
    w1v = w1[:hidden_size]            # (hidden, input)
    b1v = b1[:hidden_size, 0]         # (hidden,)
    w2v = w2[0, :hidden_size]         # (hidden,)
    hidden_ref = jnp.maximum(x @ w1v.T + b1v, 0.0)
    ref = jnp.maximum(hidden_ref @ w2v[:, None] + b2[0, 0], 0.0)   # (B, 1)

    assert out.shape == (batch, 1), out.shape
    max_err = float(jnp.max(jnp.abs(out - ref)))
    assert jnp.allclose(out, ref, atol=5e-5, rtol=5e-5), max_err
    print("KERNEL_OK")
</pallas_src>

<mosaic_0001>
module attributes {stable_mosaic.version = 11 : i64} {
  func.func @net_kernel(%arg0: i32, %arg1: memref<512x8xf32, #tpu.memory_space<vmem>>, %arg2: memref<104x8xf32, #tpu.memory_space<vmem>>, %arg3: memref<104x1xf32, #tpu.memory_space<vmem>>, %arg4: memref<8x104xf32, #tpu.memory_space<vmem>>, %arg5: memref<1x1xf32, #tpu.memory_space<smem>>, %arg6: memref<1x512xf32, #tpu.memory_space<vmem>>) attributes {dimension_semantics = [#tpu.dimension_semantics<parallel>], iteration_bounds = array<i64: 2>, scalar_prefetch = 0 : i64, scratch_operands = 0 : i64, tpu.core_type = #tpu.core_type<tc>, window_params = [{transform_indices = @transform_0, window_bounds = array<i64: 512, 8>}, {pipeline_mode = #tpu.pipeline_mode<synchronous>, transform_indices = @transform_1, window_bounds = array<i64: 104, 8>}, {pipeline_mode = #tpu.pipeline_mode<synchronous>, transform_indices = @transform_2, window_bounds = array<i64: 104, 1>}, {pipeline_mode = #tpu.pipeline_mode<synchronous>, transform_indices = @transform_3, window_bounds = array<i64: 8, 104>}, {transform_indices = @transform_4, window_bounds = array<i64: 1, 1>}, {transform_indices = @transform_5, window_bounds = array<i64: 1, 512>}]} {
    %c0 = arith.constant 0 : index
    %c0_0 = arith.constant 0 : index
    %0 = vector.load %arg2[%c0, %c0_0] : memref<104x8xf32, #tpu.memory_space<vmem>>, vector<104x8xf32>
    %c0_1 = arith.constant 0 : index
    %c0_2 = arith.constant 0 : index
    %1 = vector.load %arg1[%c0_1, %c0_2] : memref<512x8xf32, #tpu.memory_space<vmem>>, vector<512x8xf32>
    %cst = arith.constant dense<0.000000e+00> : vector<104x512xf32>
    %2 = tpu.matmul %0, %1, %cst {dimension_numbers = #tpu.dot_dimension_numbers<[1], [1], [0], [0], [0, 0, 1, 0], [], []>} : vector<104x8xf32>, vector<512x8xf32>, vector<104x512xf32> -> vector<104x512xf32>
    %c0_3 = arith.constant 0 : index
    %c0_4 = arith.constant 0 : index
    %3 = vector.load %arg3[%c0_3, %c0_4] : memref<104x1xf32, #tpu.memory_space<vmem>>, vector<104x1xf32>
    %4 = vector.broadcast %3 : vector<104x1xf32> to vector<104x512xf32>
    %5 = arith.addf %2, %4 : vector<104x512xf32>
    %cst_5 = arith.constant 0.000000e+00 : f32
    %6 = vector.broadcast %cst_5 : f32 to vector<104x512xf32>
    %7 = arith.maximumf %5, %6 : vector<104x512xf32>
    %c0_6 = arith.constant 0 : index
    %c0_7 = arith.constant 0 : index
    %8 = vector.load %arg4[%c0_6, %c0_7] : memref<8x104xf32, #tpu.memory_space<vmem>>, vector<8x104xf32>
    %cst_8 = arith.constant dense<0.000000e+00> : vector<8x512xf32>
    %9 = tpu.matmul %8, %7, %cst_8 {dimension_numbers = #tpu.dot_dimension_numbers<[1], [0], [0], [1], [0, 0, 1, 1], [], []>} : vector<8x104xf32>, vector<104x512xf32>, vector<8x512xf32> -> vector<8x512xf32>
    %10 = vector.extract_strided_slice %9 {offsets = [0, 0], sizes = [1, 512], strides = [1, 1]} : vector<8x512xf32> to vector<1x512xf32>
    %c0_9 = arith.constant 0 : index
    %c0_10 = arith.constant 0 : index
    %11 = memref.load %arg5[%c0_9, %c0_10] : memref<1x1xf32, #tpu.memory_space<smem>>
    %12 = vector.broadcast %11 : f32 to vector<1x512xf32>
    %13 = arith.addf %10, %12 : vector<1x512xf32>
    %cst_11 = arith.constant 0.000000e+00 : f32
    %14 = vector.broadcast %cst_11 : f32 to vector<1x512xf32>
    %15 = arith.maximumf %13, %14 : vector<1x512xf32>
    %c0_12 = arith.constant 0 : index
    %c0_13 = arith.constant 0 : index
    %16 = vector.load %arg6[%c0_12, %c0_13] : memref<1x512xf32, #tpu.memory_space<vmem>>, vector<1x512xf32>
    tpu.vector_store %arg6[%c0_12, %c0_13], %15 {strides = array<i32>} : memref<1x512xf32, #tpu.memory_space<vmem>>, vector<1x512xf32>,
    return
  }
  func.func @transform_0(%arg0: i32) -> (i32, i32) {
    %c0_i32 = arith.constant 0 : i32
    %c0_i32_0 = arith.constant 0 : i32
    return %arg0, %c0_i32 : i32, i32
  }
  func.func @transform_1(%arg0: i32) -> (i32, i32) {
    %c0_i32 = arith.constant 0 : i32
    %c0_i32_0 = arith.constant 0 : i32
    %c0_i32_1 = arith.constant 0 : i32
    return %c0_i32, %c0_i32_0 : i32, i32
  }
  func.func @transform_2(%arg0: i32) -> (i32, i32) {
    %c0_i32 = arith.constant 0 : i32
    %c0_i32_0 = arith.constant 0 : i32
    %c0_i32_1 = arith.constant 0 : i32
    return %c0_i32, %c0_i32_0 : i32, i32
  }
  func.func @transform_3(%arg0: i32) -> (i32, i32) {
    %c0_i32 = arith.constant 0 : i32
    %c0_i32_0 = arith.constant 0 : i32
    %c0_i32_1 = arith.constant 0 : i32
    return %c0_i32, %c0_i32_0 : i32, i32
  }
  func.func @transform_4(%arg0: i32) -> (i32, i32) {
    %c0_i32 = arith.constant 0 : i32
    %c0_i32_0 = arith.constant 0 : i32
    %c0_i32_1 = arith.constant 0 : i32
    return %c0_i32, %c0_i32_0 : i32, i32
  }
  func.func @transform_5(%arg0: i32) -> (i32, i32) {
    %c0_i32 = arith.constant 0 : i32
    %c0_i32_0 = arith.constant 0 : i32
    return %c0_i32, %arg0 : i32, i32
  }
}

</mosaic_0001>

<llo_original>
// kernel: net_forward.1
$region0: #{net_forward.1}
  #allocation0 [shape = 'u32[]', space=smem, size = 0x4, offset = 0x4, fixed_abs, tag = 'smem constant byte address 0x4 - core index']
  #allocation1 [shape = 'u32[144,128]{1,0:T(1,128)}', space=vmem, size = 0x12000, scoped, tag = 'internal scratch']
  #allocation2 [shape = 'f32[1,1]{1,0:T(1,128)S(6)}', space=smem, size = 0x200, scoped, tag = 'scoped memory for net_forward.1']
  %s0 = inlined_call_operand.vmem [shape: f32[850,8], index: 0, kind: input, shape index: {}]
  %s1 = inlined_call_operand.vmem [shape: f32[104,8], index: 1, kind: input, shape index: {}]
  %s2 = inlined_call_operand.vmem [shape: f32[104,1], index: 2, kind: input, shape index: {}]
  %s3 = inlined_call_operand.vmem [shape: f32[8,104], index: 3, kind: input, shape index: {}]
  %s4 = inlined_call_operand.<no memory space> [shape: f32[1,1], index: 4, kind: input, shape index: {}]
  %s5 = inlined_call_operand.hbm [shape: f32[1,850], index: 5, kind: output, shape index: {}]
  %s6 = sld [smem:[#allocation0]]
  $region53: #{net_forward.1} parent=0
    _
  %s8 = ssub.s32 1, %s6
  %s9 = scalar_select 0, %s8, %s6
  %10 = sst [smem:[#allocation2]] %s4
  $region1: #{net_forward.1} parent=0
    #allocation3 [shape = 'u8[4096]{0}', space=vmem, size = 0x1000, scoped, tag = 'output window, operand 0']
    #allocation4 [shape = 's32[2]{0}', space=sflag, size = 0x8, scoped, tag = 'scoped memory for net_forward.1']
    %11 = vsyncpa [#allocation4], 0
    %s12 = scalar_lea.sflag [#allocation4], 1
    %13 = vsyncpa %s12, 0
    loop: start=0, step=1, limit=4
    $region2: #{net_forward.1} parent=1 // loop_pre_header
      _
    $region3: #{net_forward.1} parent=1 // loop_header
      %s15 = sphi 0, %s19
      %p16 = scmp.ge.s32.totalorder %s15, 4
      %s25 = sphi 0, %s27
      %s28 = sphi 0, %s25
      %s29 = sphi 0, %s28
      %s45 = sphi 0, %s29
      %s49 = sphi 0, %s49
      %s51 = sphi 0, %s49
      %s52 = sphi 0, %s51
      %s66 = sphi 0, %s52
      %s70 = sphi 0, %s70
      %s72 = sphi 0, %s70
      %s73 = sphi 0, %s72
      %s87 = sphi 0, %s73
      %s91 = sphi 0, %s91
      %s93 = sphi 0, %s91
      %s94 = sphi 0, %s93
      %s108 = sphi 0, %s94
      %s112 = sphi 0, %s112
      %s114 = sphi 0, %s112
      %s115 = sphi 0, %s114
      %s129 = sphi 0, %s115
      %s135 = sphi 0, %s137
      %s138 = sphi 0, %s135
      %s139 = sphi 0, %s138
      %s155 = sphi 0, %s139
    $region4: #{net_forward.1} parent=1 // loop_header_branch
      %18 = sbr.rel (%p16) target = $region8
    $region5: #{net_forward.1} parent=1 // loop_body
      %s20 = ssub.s32 %s15, 1
      %s21 = ssub.s32 %s15, 2
      %s22 = sadd.s32 %s15, 1
      %s23 = ssub.s32 %s15, %s22
      %p24 = scmp.eq.s32.totalorder %s23, 0
      %s26 = sadd.s32 %s25, 1
      %s27 = scalar_select %p24, %s25, %s26
      %p30 = pneg %p24
      %p31 = scmp.eq.s32.totalorder %s15, 1
      %p32 = por %p30, %p31
      %p33 = scmp.ne.s32.totalorder %s25, %s28
      %p34 = scmp.eq.s32.totalorder %s15, 0
      %p35 = por %p33, %p34
      %p36 = scmp.ne.s32.totalorder %s25, %s28
      %p37 = scmp.eq.s32.totalorder %s20, 1
      %p38 = por %p36, %p37
      %p39 = scmp.ne.s32.totalorder %s28, %s29
      %p40 = scmp.eq.s32.totalorder %s20, 0
      %p41 = por %p39, %p40
      %p42 = scmp.ne.s32.totalorder %s28, %s29
      %p43 = scmp.eq.s32.totalorder %s21, 1
      %p44 = por %p42, %p43
      %p46 = scmp.ne.s32.totalorder %s29, %s45
      %p47 = scmp.eq.s32.totalorder %s21, 0
      %p48 = por %p46, %p47
      %s50 = sadd.s32 %s49, 1
      %p53 = scmp.eq.s32.totalorder %s15, 1
      %p54 = scmp.ne.s32.totalorder %s49, %s51
      %p55 = scmp.eq.s32.totalorder %s15, 0
      %p56 = por %p54, %p55
      %p57 = scmp.ne.s32.totalorder %s49, %s51
      %p58 = scmp.eq.s32.totalorder %s20, 1
      %p59 = por %p57, %p58
      %p60 = scmp.ne.s32.totalorder %s51, %s52
      %p61 = scmp.eq.s32.totalorder %s20, 0
      %p62 = por %p60, %p61
      %p63 = scmp.ne.s32.totalorder %s51, %s52
      %p64 = scmp.eq.s32.totalorder %s21, 1
      %p65 = por %p63, %p64
      %p67 = scmp.ne.s32.totalorder %s52, %s66
      %p68 = scmp.eq.s32.totalorder %s21, 0
      %p69 = por %p67, %p68
      %s71 = sadd.s32 %s70, 1
      %p74 = scmp.eq.s32.totalorder %s15, 1
      %p75 = scmp.ne.s32.totalorder %s70, %s72
      %p76 = scmp.eq.s32.totalorder %s15, 0
      %p77 = por %p75, %p76
      %p78 = scmp.ne.s32.totalorder %s70, %s72
      %p79 = scmp.eq.s32.totalorder %s20, 1
      %p80 = por %p78, %p79
      %p81 = scmp.ne.s32.totalorder %s72, %s73
      %p82 = scmp.eq.s32.totalorder %s20, 0
      %p83 = por %p81, %p82
      %p84 = scmp.ne.s32.totalorder %s72, %s73
      %p85 = scmp.eq.s32.totalorder %s21, 1
      %p86 = por %p84, %p85
      %p88 = scmp.ne.s32.totalorder %s73, %s87
      %p89 = scmp.eq.s32.totalorder %s21, 0
      %p90 = por %p88, %p89
      %s92 = sadd.s32 %s91, 1
      %p95 = scmp.eq.s32.totalorder %s15, 1
      %p96 = scmp.ne.s32.totalorder %s91, %s93
      %p97 = scmp.eq.s32.totalorder %s15, 0
      %p98 = por %p96, %p97
      %p99 = scmp.ne.s32.totalorder %s91, %s93
      %p100 = scmp.eq.s32.totalorder %s20, 1
      %p101 = por %p99, %p100
      %p102 = scmp.ne.s32.totalorder %s93, %s94
      %p103 = scmp.eq.s32.totalorder %s20, 0
      %p104 = por %p102, %p103
      %p105 = scmp.ne.s32.totalorder %s93, %s94
      %p106 = scmp.eq.s32.totalorder %s21, 1
      %p107 = por %p105, %p106
      %p109 = scmp.ne.s32.totalorder %s94, %s108
      %p110 = scmp.eq.s32.totalorder %s21, 0
      %p111 = por %p109, %p110
      %s113 = sadd.s32 %s112, 1
      %p116 = scmp.eq.s32.totalorder %s15, 1
      %p117 = scmp.ne.s32.totalorder %s112, %s114
      %p118 = scmp.eq.s32.totalorder %s15, 0
      %p119 = por %p117, %p118
      %p120 = scmp.ne.s32.totalorder %s112, %s114
      %p121 = scmp.eq.s32.totalorder %s20, 1
      %p122 = por %p120, %p121
      %p123 = scmp.ne.s32.totalorder %s114, %s115
      %p124 = scmp.eq.s32.totalorder %s20, 0
      %p125 = por %p123, %p124
      %p126 = scmp.ne.s32.totalorder %s114, %s115
      %p127 = scmp.eq.s32.totalorder %s21, 1
      %p128 = por %p126, %p127
      %p130 = scmp.ne.s32.totalorder %s115, %s129
      %p131 = scmp.eq.s32.totalorder %s21, 0
      %p132 = por %p130, %p131
      %s133 = ssub.s32 %s15, %s22
      %p134 = scmp.eq.s32.totalorder %s133, 0
      %s136 = sadd.s32 %s135, 1
      %s137 = scalar_select %p134, %s135, %s136
      %p140 = pneg %p134
      %p141 = scmp.eq.s32.totalorder %s15, 1
      %p142 = por %p140, %p141
      %p143 = scmp.ne.s32.totalorder %s135, %s138
      %p144 = scmp.eq.s32.totalorder %s15, 0
      %p145 = por %p143, %p144
      %p146 = scmp.ne.s32.totalorder %s135, %s138
      %p147 = scmp.eq.s32.totalorder %s20, 1
      %p148 = por %p146, %p147
      %p149 = scmp.ne.s32.totalorder %s138, %s139
      %p150 = scmp.eq.s32.totalorder %s20, 0
      %p151 = por %p149, %p150
      %p152 = scmp.ne.s32.totalorder %s138, %s139
      %p153 = scmp.eq.s32.totalorder %s21, 1
      %p154 = por %p152, %p153
      %p156 = scmp.ne.s32.totalorder %s139, %s155
      %p157 = scmp.eq.s32.totalorder %s21, 0
      %p158 = por %p156, %p157
      %p159 = scmp.le.s32.totalorder 1, %s15
      %p160 = scmp.lt.s32.totalorder %s15, 3
      %p161 = pnand %p159, %p160
      %p162 = pneg %p161
      // Predicated region
      $region9: #{net_forward.1} parent=5 // pred_check
        _
      $region10: #{net_forward.1} parent=5 // pred_check_branch
        %164 = sbr.rel (%p161) target = $region12
      $region11: #{net_forward.1} parent=5 // pred_region
        %s165 = ssub.s32 %s15, 1
        // Predicated region
        $region13: #{net_forward.1} parent=11 // pred_check
          %p166 = pneg %p62
        $region14: #{net_forward.1} parent=11 // pred_check_branch
          %168 = sbr.rel (%p166) target = $region16
        $region15: #{net_forward.1} parent=11 // pred_region
          _
        $region16: #{net_forward.1} parent=11 // pred_fallthru
          _
        // Predicated region
        $region17: #{net_forward.1} parent=11 // pred_check
          %p169 = pneg %p83
        $region18: #{net_forward.1} parent=11 // pred_check_branch
          %171 = sbr.rel (%p169) target = $region20
        $region19: #{net_forward.1} parent=11 // pred_region
          _
        $region20: #{net_forward.1} parent=11 // pred_fallthru
          _
        // Predicated region
        $region21: #{net_forward.1} parent=11 // pred_check
          %p172 = pneg %p104
        $region22: #{net_forward.1} parent=11 // pred_check_branch
          %174 = sbr.rel (%p172) target = $region24
        $region23: #{net_forward.1} parent=11 // pred_region
          _
        $region24: #{net_forward.1} parent=11 // pred_fallthru
          _
        // Predicated region
        $region25: #{net_forward.1} parent=11 // pred_check
          %p175 = pneg %p125
        $region26: #{net_forward.1} parent=11 // pred_check_branch
          %177 = sbr.rel (%p175) target = $region28
        $region27: #{net_forward.1} parent=11 // pred_region
          _
        $region28: #{net_forward.1} parent=11 // pred_fallthru
          _
      $region12: #{net_forward.1} parent=5 // pred_fallthru
        _
      %p178 = scmp.lt.s32.totalorder %s15, 2
      // Predicated region
      $region29: #{net_forward.1} parent=5 // pred_check
        %p179 = pneg %p178
      $region30: #{net_forward.1} parent=5 // pred_check_branch
        %181 = sbr.rel (%p179) target = $region32
      $region31: #{net_forward.1} parent=5 // pred_region
        // Predicated region
        $region33: #{net_forward.1} parent=31 // pred_check
          %p182 = pneg %p35
        $region34: #{net_forward.1} parent=31 // pred_check_branch
          %184 = sbr.rel (%p182) target = $region36
        $region35: #{net_forward.1} parent=31 // pred_region
          %s185 = smul.u32 64, %s15
          %s186 = ssub.s32 107, %s185
          %p187 = scmp.lt.s32.totalorder %s186, 64
          %s188 = scalar_select %p187, %s186, 64
          %s189 = smul.u32 128, %s188
          %p190 = scmp.lt.s32.totalorder %s185, 106
          %s191 = scalar_select %p190, %s185, 106
          %s192 = smul.addr %s191, 8
          %s193 = scalar_lea.vmem %s0, %s192
          %s194 = smul.u32 64, %s15
          %s195 = ssub.s32 107, %s194
          %p196 = scmp.lt.s32.totalorder %s195, 64
          %s197 = scalar_select %p196, %s195, 64
          %s198 = smul.u32 128, %s197
        $region36: #{net_forward.1} parent=31 // pred_fallthru
          _
      $region32: #{net_forward.1} parent=5 // pred_fallthru
        _
      %p199 = scmp.le.s32.totalorder 1, %s15
      %p200 = scmp.lt.s32.totalorder %s15, 3
      %p201 = pnand %p199, %p200
      %p202 = pneg %p201
      // Predicated region
      $region37: #{net_forward.1} parent=5 // pred_check
        _
      $region38: #{net_forward.1} parent=5 // pred_check_branch
        %204 = sbr.rel (%p201) target = $region40
      $region39: #{net_forward.1} parent=5 // pred_region
        %s205 = ssub.s32 %s15, 1
        %s206 = smul.u32 64, %s20
        %s207 = ssub.s32 107, %s206
        %p208 = scmp.lt.s32.totalorder %s207, 64
        %s209 = scalar_select %p208, %s207, 64
        %s210 = smul.u32 128, %s209
        %p211 = scmp.lt.s32.totalorder %s206, 106
        %s212 = scalar_select %p211, %s206, 106
        %s213 = smul.addr %s212, 8
        %s214 = scalar_lea.vmem %s0, %s213
        %p215 = pneg %p41
        %p216 = pneg %p38
        %p217 = pneg %p62
        %p218 = pneg %p59
        %p219 = pneg %p83
        %p220 = pneg %p80
        %p221 = pneg %p104
        %p222 = pneg %p101
        %p223 = pneg %p125
        %p224 = pneg %p122
        %p225 = pneg %p151
        %p226 = pneg %p148
        %s227 = sand.u32 %s138, 1
        %s228 = scalar_lea.sflag [#allocation4], %s227
        %s229 = sand.u32 %s138, 1
        %s230 = smul.addr %s229, 4
        %s231 = scalar_lea.vmem [#allocation3], %s230
        %s232 = smul.u32 64, %s20
        %s233 = ssub.s32 107, %s232
        %p234 = scmp.lt.s32.totalorder %s233, 64
        %s235 = scalar_select %p234, %s233, 64
        %s236 = smul.u32 128, %s235
        %p237 = scmp.lt.s32.totalorder %s232, 106
        %s238 = scalar_select %p237, %s232, 106
        %s239 = smul.addr %s238, 8
        %s240 = scalar_lea.vmem %s0, %s239
        %s241 = smul.u32 64, %s20
        %s242 = ssub.s32 107, %s241
        %p243 = scmp.lt.s32.totalorder %s242, 64
        %s244 = scalar_select %p243, %s242, 64
        %s245 = smul.u32 128, %s244
        %s246 = smul.u32 4, %s20
        %s247 = ssub.s32 7, %s246
        %p248 = scmp.lt.s32.totalorder %s247, 4
        %s249 = scalar_select %p248, %s247, 4
        %s250 = smul.u32 16, %s249
        %v251 = vld [vmem:[%s1] sm:$0xff]
        %v252 = vld [vmem:[%s1 + $0x8] sm:$0xff]
        %v253 = vld [vmem:[%s1 + $0x10] sm:$0xff]
        %v254 = vld [vmem:[%s1 + $0x18] sm:$0xff]
        %v255 = vld [vmem:[%s1 + $0x20] sm:$0xff]
        %v256 = vld [vmem:[%s1 + $0x28] sm:$0xff]
        %v257 = vld [vmem:[%s1 + $0x30] sm:$0xff]
        %v258 = vld [vmem:[%s1 + $0x38] sm:$0xff]
        %v259 = vld [vmem:[%s1 + $0x40] sm:$0xff]
        %v260 = vld [vmem:[%s1 + $0x48] sm:$0xff]
        %v261 = vld [vmem:[%s1 + $0x50] sm:$0xff]
        %v262 = vld [vmem:[%s1 + $0x58] sm:$0xff]
        %v263 = vld [vmem:[%s1 + $0x60] sm:$0xff]
        %v264 = vld [vmem:[%s240] sm:$0xff]
        %v265 = vld [vmem:[%s240 + $0x8] sm:$0xff]
        %v266 = vld [vmem:[%s240 + $0x10] sm:$0xff]
        %v267 = vld [vmem:[%s240 + $0x18] sm:$0xff]
        %v268 = vld [vmem:[%s240 + $0x20] sm:$0xff]
        %v269 = vld [vmem:[%s240 + $0x28] sm:$0xff]
        %v270 = vld [vmem:[%s240 + $0x30] sm:$0xff]
        %v271 = vld [vmem:[%s240 + $0x38] sm:$0xff]
        %v272 = vld [vmem:[%s240 + $0x40] sm:$0xff]
        %v273 = vld [vmem:[%s240 + $0x48] sm:$0xff]
        %v274 = vld [vmem:[%s240 + $0x50] sm:$0xff]
        %v275 = vld [vmem:[%s240 + $0x58] sm:$0xff]
        %v276 = vld [vmem:[%s240 + $0x60] sm:$0xff]
        %v277 = vld [vmem:[%s240 + $0x68] sm:$0xff]
        %v278 = vld [vmem:[%s240 + $0x70] sm:$0xff]
        %v279 = vld [vmem:[%s240 + $0x78] sm:$0xff]
        %v280 = vld [vmem:[%s240 + $0x80] sm:$0xff]
        %v281 = vld [vmem:[%s240 + $0x88] sm:$0xff]
        %v282 = vld [vmem:[%s240 + $0x90] sm:$0xff]
        %v283 = vld [vmem:[%s240 + $0x98] sm:$0xff]
        %v284 = vld [vmem:[%s240 + $0xa0] sm:$0xff]
        %v285 = vld [vmem:[%s240 + $0xa8] sm:$0xff]
        %v286 = vld [vmem:[%s240 + $0xb0] sm:$0xff]
        %v287 = vld [vmem:[%s240 + $0xb8] sm:$0xff]
        %v288 = vld [vmem:[%s240 + $0xc0] sm:$0xff]
        %v289 = vld [vmem:[%s240 + $0xc8] sm:$0xff]
        %v290 = vld [vmem:[%s240 + $0xd0] sm:$0xff]
        %v291 = vld [vmem:[%s240 + $0xd8] sm:$0xff]
        %v292 = vld [vmem:[%s240 + $0xe0] sm:$0xff]
        %v293 = vld [vmem:[%s240 + $0xe8] sm:$0xff]
        %v294 = vld [vmem:[%s240 + $0xf0] sm:$0xff]
        %v295 = vld [vmem:[%s240 + $0xf8] sm:$0xff]
        %v296 = vld [vmem:[%s240 + $0x100] sm:$0xff]
        %v297 = vld [vmem:[%s240 + $0x108] sm:$0xff]
        %v298 = vld [vmem:[%s240 + $0x110] sm:$0xff]
        %v299 = vld [vmem:[%s240 + $0x118] sm:$0xff]
        %v300 = vld [vmem:[%s240 + $0x120] sm:$0xff]
        %v301 = vld [vmem:[%s240 + $0x128] sm:$0xff]
        %v302 = vld [vmem:[%s240 + $0x130] sm:$0xff]
        %v303 = vld [vmem:[%s240 + $0x138] sm:$0xff]
        %v304 = vld [vmem:[%s240 + $0x140] sm:$0xff]
        %v305 = vld [vmem:[%s240 + $0x148] sm:$0xff]
        %v306 = vld [vmem:[%s240 + $0x150] sm:$0xff]
        %v307 = vld [vmem:[%s240 + $0x158] sm:$0xff]
        %v308 = vld [vmem:[%s240 + $0x160] sm:$0xff]
        %v309 = vld [vmem:[%s240 + $0x168] sm:$0xff]
        %v310 = vld [vmem:[%s240 + $0x170] sm:$0xff]
        %v311 = vld [vmem:[%s240 + $0x178] sm:$0xff]
        %v312 = vld [vmem:[%s240 + $0x180] sm:$0xff]
        %v313 = vld [vmem:[%s240 + $0x188] sm:$0xff]
        %v314 = vld [vmem:[%s240 + $0x190] sm:$0xff]
        %v315 = vld [vmem:[%s240 + $0x198] sm:$0xff]
        %v316 = vld [vmem:[%s240 + $0x1a0] sm:$0xff]
        %v317 = vld [vmem:[%s240 + $0x1a8] sm:$0xff]
        %v318 = vld [vmem:[%s240 + $0x1b0] sm:$0xff]
        %v319 = vld [vmem:[%s240 + $0x1b8] sm:$0xff]
        %v320 = vld [vmem:[%s240 + $0x1c0] sm:$0xff]
        %v321 = vld [vmem:[%s240 + $0x1c8] sm:$0xff]
        %v322 = vld [vmem:[%s240 + $0x1d0] sm:$0xff]
        %v323 = vld [vmem:[%s240 + $0x1d8] sm:$0xff]
        %v324 = vld [vmem:[%s240 + $0x1e0] sm:$0xff]
        %v325 = vld [vmem:[%s240 + $0x1e8] sm:$0xff]
        %v326 = vld [vmem:[%s240 + $0x1f0] sm:$0xff]
        %v327 = vld [vmem:[%s240 + $0x1f8] sm:$0xff]
        %v328 = vld [vmem:[%s2] sm:$0xff]
        %v329 = vld [vmem:[%s2 + $0x8] sm:$0xff]
        %v330 = vld [vmem:[%s2 + $0x10] sm:$0xff]
        %v331 = vld [vmem:[%s2 + $0x18] sm:$0xff]
        %v332 = vld [vmem:[%s2 + $0x20] sm:$0xff]
        %v333 = vld [vmem:[%s2 + $0x28] sm:$0xff]
        %v334 = vld [vmem:[%s2 + $0x30] sm:$0xff]
        %v335 = vld [vmem:[%s2 + $0x38] sm:$0xff]
        %v336 = vld [vmem:[%s2 + $0x40] sm:$0xff]
        %v337 = vld [vmem:[%s2 + $0x48] sm:$0xff]
        %v338 = vld [vmem:[%s2 + $0x50] sm:$0xff]
        %v339 = vld [vmem:[%s2 + $0x58] sm:$0xff]
        %v340 = vld [vmem:[%s2 + $0x60] sm:$0xff]
        %342 = vset.pattern.permute.xlu0 0
        %343 = vperm.xlu0 %342, %v328
        %v344 = vpop.permute.xlu0 %343
        %347 = vset.pattern.permute.xlu0 0
        %348 = vperm.xlu0 %347, %v329
        %v349 = vpop.permute.xlu0 %348
        %352 = vset.pattern.permute.xlu0 0
        %353 = vperm.xlu0 %352, %v330
        %v354 = vpop.permute.xlu0 %353
        %357 = vset.pattern.permute.xlu0 0
        %358 = vperm.xlu0 %357, %v331
        %v359 = vpop.permute.xlu0 %358
        %362 = vset.pattern.permute.xlu0 0
        %363 = vperm.xlu0 %362, %v332
        %v364 = vpop.permute.xlu0 %363
        %367 = vset.pattern.permute.xlu0 0
        %368 = vperm.xlu0 %367, %v333
        %v369 = vpop.permute.xlu0 %368
        %372 = vset.pattern.permute.xlu0 0
        %373 = vperm.xlu0 %372, %v334
        %v374 = vpop.permute.xlu0 %373
        %377 = vset.pattern.permute.xlu0 0
        %378 = vperm.xlu0 %377, %v335
        %v379 = vpop.permute.xlu0 %378
        %382 = vset.pattern.permute.xlu0 0
        %383 = vperm.xlu0 %382, %v336
        %v384 = vpop.permute.xlu0 %383
        %387 = vset.pattern.permute.xlu0 0
        %388 = vperm.xlu0 %387, %v337
        %v389 = vpop.permute.xlu0 %388
        %392 = vset.pattern.permute.xlu0 0
        %393 = vperm.xlu0 %392, %v338
        %v394 = vpop.permute.xlu0 %393
        %397 = vset.pattern.permute.xlu0 0
        %398 = vperm.xlu0 %397, %v339
        %v399 = vpop.permute.xlu0 %398
        %402 = vset.pattern.permute.xlu0 0
        %403 = vperm.xlu0 %402, %v340
        %v404 = vpop.permute.xlu0 %403
        %vm406 = vcmask 64512
        %v408 = vsel %vm406, %v251, 0
        %v411 = vsel %vm406, %v252, 0
        %v414 = vsel %vm406, %v253, 0
        %v417 = vsel %vm406, %v254, 0
        %v420 = vsel %vm406, %v255, 0
        %v423 = vsel %vm406, %v256, 0
        %v426 = vsel %vm406, %v257, 0
        %v429 = vsel %vm406, %v258, 0
        %v432 = vsel %vm406, %v259, 0
        %v435 = vsel %vm406, %v260, 0
        %v438 = vsel %vm406, %v261, 0
        %v441 = vsel %vm406, %v262, 0
        %v444 = vsel %vm406, %v263, 0
        %v447 = vsel %vm406, %v264, 0
        %v450 = vsel %vm406, %v265, 0
        %v453 = vsel %vm406, %v266, 0
        %v456 = vsel %vm406, %v267, 0
        %v459 = vsel %vm406, %v268, 0
        %v462 = vsel %vm406, %v269, 0
        %v465 = vsel %vm406, %v270, 0
        %v468 = vsel %vm406, %v271, 0
        %v471 = vsel %vm406, %v272, 0
        %v474 = vsel %vm406, %v273, 0
        %v477 = vsel %vm406, %v274, 0
        %v480 = vsel %vm406, %v275, 0
        %v483 = vsel %vm406, %v276, 0
        %v486 = vsel %vm406, %v277, 0
        %v489 = vsel %vm406, %v278, 0
        %v492 = vsel %vm406, %v279, 0
        %v495 = vsel %vm406, %v280, 0
        %v498 = vsel %vm406, %v281, 0
        %v501 = vsel %vm406, %v282, 0
        %v504 = vsel %vm406, %v283, 0
        %v507 = vsel %vm406, %v284, 0
        %v510 = vsel %vm406, %v285, 0
        %v513 = vsel %vm406, %v286, 0
        %v516 = vsel %vm406, %v287, 0
        %v519 = vsel %vm406, %v288, 0
        %v522 = vsel %vm406, %v289, 0
        %v525 = vsel %vm406, %v290, 0
        %v528 = vsel %vm406, %v291, 0
        %v531 = vsel %vm406, %v292, 0
        %v534 = vsel %vm406, %v293, 0
        %v537 = vsel %vm406, %v294, 0
        %v540 = vsel %vm406, %v295, 0
        %v543 = vsel %vm406, %v296, 0
        %v546 = vsel %vm406, %v297, 0
        %v549 = vsel %vm406, %v298, 0
        %v552 = vsel %vm406, %v299, 0
        %v555 = vsel %vm406, %v300, 0
        %v558 = vsel %vm406, %v301, 0
        %v561 = vsel %vm406, %v302, 0
        %v564 = vsel %vm406, %v303, 0
        %v567 = vsel %vm406, %v304, 0
        %v570 = vsel %vm406, %v305, 0
        %v573 = vsel %vm406, %v306, 0
        %v576 = vsel %vm406, %v307, 0
        %v579 = vsel %vm406, %v308, 0
        %v582 = vsel %vm406, %v309, 0
        %v585 = vsel %vm406, %v310, 0
        %v588 = vsel %vm406, %v311, 0
        %v591 = vsel %vm406, %v312, 0
        %v594 = vsel %vm406, %v313, 0
        %v597 = vsel %vm406, %v314, 0
        %v600 = vsel %vm406, %v315, 0
        %v603 = vsel %vm406, %v316, 0
        %v606 = vsel %vm406, %v317, 0
        %v609 = vsel %vm406, %v318, 0
        %v612 = vsel %vm406, %v319, 0
        %v615 = vsel %vm406, %v320, 0
        %v618 = vsel %vm406, %v321, 0
        %v621 = vsel %vm406, %v322, 0
        %v624 = vsel %vm406, %v323, 0
        %v627 = vsel %vm406, %v324, 0
        %v630 = vsel %vm406, %v325, 0
        %v633 = vsel %vm406, %v326, 0
        %v636 = vsel %vm406, %v327, 0
        %638 = vmatprep.subr.mxu0 0.0
        %639 = vmatpush1.xpose.msra.mxu0 %v447
        %640 = vmatprep.subr.mxu0 0.0
        %641 = vmatpush1.xpose.msra.mxu0 %v450
        %642 = vmatprep.subr.mxu0 0.0
        %643 = vmatpush1.xpose.msra.mxu0 %v453
        %644 = vmatprep.subr.mxu0 0.0
        %645 = vmatpush1.xpose.msra.mxu0 %v456
        %646 = vmatprep.subr.mxu0 0.0
        %647 = vmatpush1.xpose.msra.mxu0 %v459
        %648 = vmatprep.subr.mxu0 0.0
        %649 = vmatpush1.xpose.msra.mxu0 %v462
        %650 = vmatprep.subr.mxu0 0.0
        %651 = vmatpush1.xpose.msra.mxu0 %v465
        %652 = vmatprep.subr.mxu0 0.0
        %653 = vmatpush1.xpose.msra.mxu0 %v468
        %654 = vmatprep.subr.mxu0 0.0
        %655 = vmatpush1.xpose.msra.mxu0 %v471
        %656 = vmatprep.subr.mxu0 0.0
        %657 = vmatpush1.xpose.msra.mxu0 %v474
        %658 = vmatprep.subr.mxu0 0.0
        %659 = vmatpush1.xpose.msra.mxu0 %v477
        %660 = vmatprep.subr.mxu0 0.0
        %661 = vmatpush1.xpose.msra.mxu0 %v480
        %662 = vmatprep.subr.mxu0 0.0
        %663 = vmatpush1.xpose.msra.mxu0 %v483
        %664 = vmatprep.subr.mxu0 0.0
        %665 = vmatpush1.xpose.msra.mxu0 %v486
        %666 = vmatprep.subr.mxu0 0.0
        %667 = vmatpush1.xpose.msra.mxu0 %v489
        %668 = vmatprep.subr.mxu0 0.0
        %669 = vmatpush1.xpose.msra.mxu0 %v492
        %670 = vmatprep.subr.mxu0 0.0
        %671 = vmatpush1.xpose.msra.mxu0 %v495
        %672 = vmatprep.subr.mxu0 0.0
        %673 = vmatpush1.xpose.msra.mxu0 %v498
        %674 = vmatprep.subr.mxu0 0.0
        %675 = vmatpush1.xpose.msra.mxu0 %v501
        %676 = vmatprep.subr.mxu0 0.0
        %677 = vmatpush1.xpose.msra.mxu0 %v504
        %678 = vmatprep.subr.mxu0 0.0
        %679 = vmatpush1.xpose.msra.mxu0 %v507
        %680 = vmatprep.subr.mxu0 0.0
        %681 = vmatpush1.xpose.msra.mxu0 %v510
        %682 = vmatprep.subr.mxu0 0.0
        %683 = vmatpush1.xpose.msra.mxu0 %v513
        %684 = vmatprep.subr.mxu0 0.0
        %685 = vmatpush1.xpose.msra.mxu0 %v516
        %686 = vmatprep.subr.mxu0 0.0
        %687 = vmatpush1.xpose.msra.mxu0 %v519
        %688 = vmatprep.subr.mxu0 0.0
        %689 = vmatpush1.xpose.msra.mxu0 %v522
        %690 = vmatprep.subr.mxu0 0.0
        %691 = vmatpush1.xpose.msra.mxu0 %v525
        %692 = vmatprep.subr.mxu0 0.0
        %693 = vmatpush1.xpose.msra.mxu0 %v528
        %694 = vmatprep.subr.mxu0 0.0
        %695 = vmatpush1.xpose.msra.mxu0 %v531
        %696 = vmatprep.subr.mxu0 0.0
        %697 = vmatpush1.xpose.msra.mxu0 %v534
        %698 = vmatprep.subr.mxu0 0.0
        %699 = vmatpush1.xpose.msra.mxu0 %v537
        %700 = vmatprep.subr.mxu0 0.0
        %701 = vmatpush1.xpose.msra.mxu0 %v540
        %702 = vmatprep.mubr.f32.mxu0 0.0
        %703 = vmatmul.mubr.f32.gmra.mrb[0].mxu0 %v408
        %v704 = vpop.f32.mrb[0].mxu0
        %v705 = vadd.f32 %v344, %v704
        %v706 = vpop.f32.mrb[0].mxu0
        %v707 = vadd.f32 %v344, %v706
        %708 = vmatprep.mubr.f32.mxu0 0.0
        %709 = vmatmul.mubr.f32.gmra.mrb[0].mxu0 %v411
        %v710 = vpop.f32.mrb[0].mxu0
        %v711 = vadd.f32 %v349, %v710
        %v712 = vpop.f32.mrb[0].mxu0
        %v713 = vadd.f32 %v349, %v712
        %714 = vmatprep.mubr.f32.mxu0 0.0
        %715 = vmatmul.mubr.f32.gmra.mrb[0].mxu0 %v414
        %v716 = vpop.f32.mrb[0].mxu0
        %v717 = vadd.f32 %v354, %v716
        %v718 = vpop.f32.mrb[0].mxu0
        %v719 = vadd.f32 %v354, %v718
        %720 = vmatprep.mubr.f32.mxu0 0.0
        %721 = vmatmul.mubr.f32.gmra.mrb[0].mxu0 %v417
        %v722 = vpop.f32.mrb[0].mxu0
        %v723 = vadd.f32 %v359, %v722
        %v724 = vpop.f32.mrb[0].mxu0
        %v725 = vadd.f32 %v359, %v724
        %726 = vmatprep.mubr.f32.mxu0 0.0
        %727 = vmatmul.mubr.f32.gmra.mrb[0].mxu0 %v420
        %v728 = vpop.f32.mrb[0].mxu0
        %v729 = vadd.f32 %v364, %v728
        %v730 = vpop.f32.mrb[0].mxu0
        %v731 = vadd.f32 %v364, %v730
        %732 = vmatprep.mubr.f32.mxu0 0.0
        %733 = vmatmul.mubr.f32.gmra.mrb[0].mxu0 %v423
        %v734 = vpop.f32.mrb[0].mxu0
        %v735 = vadd.f32 %v369, %v734
        %v736 = vpop.f32.mrb[0].mxu0
        %v737 = vadd.f32 %v369, %v736
        %738 = vmatprep.mubr.f32.mxu0 0.0
        %739 = vmatmul.mubr.f32.gmra.mrb[0].mxu0 %v426
        %v740 = vpop.f32.mrb[0].mxu0
        %v741 = vadd.f32 %v374, %v740
        %v742 = vpop.f32.mrb[0].mxu0
        %v743 = vadd.f32 %v374, %v742
        %744 = vmatprep.mubr.f32.mxu0 0.0
        %745 = vmatmul.mubr.f32.gmra.mrb[0].mxu0 %v429
        %v746 = vpop.f32.mrb[0].mxu0
        %v747 = vadd.f32 %v379, %v746
        %v748 = vpop.f32.mrb[0].mxu0
        %v749 = vadd.f32 %v379, %v748
        %750 = vmatprep.mubr.f32.mxu0 0.0
        %751 = vmatmul.mubr.f32.gmra.mrb[0].mxu0 %v432
        %v752 = vpop.f32.mrb[0].mxu0
        %v753 = vadd.f32 %v384, %v752
        %v754 = vpop.f32.mrb[0].mxu0
        %v755 = vadd.f32 %v384, %v754
        %756 = vmatprep.mubr.f32.mxu0 0.0
        %757 = vmatmul.mubr.f32.gmra.mrb[0].mxu0 %v435
        %v758 = vpop.f32.mrb[0].mxu0
        %v759 = vadd.f32 %v389, %v758
        %v760 = vpop.f32.mrb[0].mxu0
        %v761 = vadd.f32 %v389, %v760
        %762 = vmatprep.mubr.f32.mxu0 0.0
        %763 = vmatmul.mubr.f32.gmra.mrb[0].mxu0 %v438
        %v764 = vpop.f32.mrb[0].mxu0
        %v765 = vadd.f32 %v394, %v764
        %v766 = vpop.f32.mrb[0].mxu0
        %v767 = vadd.f32 %v394, %v766
        %768 = vmatprep.mubr.f32.mxu0 0.0
        %769 = vmatmul.mubr.f32.gmra.mrb[0].mxu0 %v441
        %v770 = vpop.f32.mrb[0].mxu0
        %v771 = vadd.f32 %v399, %v770
        %v772 = vpop.f32.mrb[0].mxu0
        %v773 = vadd.f32 %v399, %v772
        %774 = vmatprep.mubr.f32.mxu0 0.0
        %775 = vmatmul.mubr.f32.gmra.mrb[0].mxu0 %v444
        %v776 = vpop.f32.mrb[0].mxu0
        %v777 = vadd.f32 %v404, %v776
        %v778 = vpop.f32.mrb[0].mxu0
        %v779 = vadd.f32 %v404, %v778
        %780 = vdwg.mxu0
        %781 = vmatprep.subr.mxu0 0.0
        %782 = vmatpush1.xpose.msra.mxu0 %v543
        %783 = vmatprep.subr.mxu0 0.0
        %784 = vmatpush1.xpose.msra.mxu0 %v546
        %785 = vmatprep.subr.mxu0 0.0
        %786 = vmatpush1.xpose.msra.mxu0 %v549
        %787 = vmatprep.subr.mxu0 0.0
        %788 = vmatpush1.xpose.msra.mxu0 %v552
        %789 = vmatprep.subr.mxu0 0.0
        %790 = vmatpush1.xpose.msra.mxu0 %v555
        %791 = vmatprep.subr.mxu0 0.0
        %792 = vmatpush1.xpose.msra.mxu0 %v558
        %793 = vmatprep.subr.mxu0 0.0
        %794 = vmatpush1.xpose.msra.mxu0 %v561
        %795 = vmatprep.subr.mxu0 0.0
        %796 = vmatpush1.xpose.msra.mxu0 %v564
        %797 = vmatprep.subr.mxu0 0.0
        %798 = vmatpush1.xpose.msra.mxu0 %v567
        %799 = vmatprep.subr.mxu0 0.0
        %800 = vmatpush1.xpose.msra.mxu0 %v570
        %801 = vmatprep.subr.mxu0 0.0
        %802 = vmatpush1.xpose.msra.mxu0 %v573
        %803 = vmatprep.subr.mxu0 0.0
        %804 = vmatpush1.xpose.msra.mxu0 %v576
        %805 = vmatprep.subr.mxu0 0.0
        %806 = vmatpush1.xpose.msra.mxu0 %v579
        %807 = vmatprep.subr.mxu0 0.0
        %808 = vmatpush1.xpose.msra.mxu0 %v582
        %809 = vmatprep.subr.mxu0 0.0
        %810 = vmatpush1.xpose.msra.mxu0 %v585
        %811 = vmatprep.subr.mxu0 0.0
        %812 = vmatpush1.xpose.msra.mxu0 %v588
        %813 = vmatprep.subr.mxu0 0.0
        %814 = vmatpush1.xpose.msra.mxu0 %v591
        %815 = vmatprep.subr.mxu0 0.0
        %816 = vmatpush1.xpose.msra.mxu0 %v594
        %817 = vmatprep.subr.mxu0 0.0
        %818 = vmatpush1.xpose.msra.mxu0 %v597
        %819 = vmatprep.subr.mxu0 0.0
        %820 = vmatpush1.xpose.msra.mxu0 %v600
        %821 = vmatprep.subr.mxu0 0.0
        %822 = vmatpush1.xpose.msra.mxu0 %v603
        %823 = vmatprep.subr.mxu0 0.0
        %824 = vmatpush1.xpose.msra.mxu0 %v606
        %825 = vmatprep.subr.mxu0 0.0
        %826 = vmatpush1.xpose.msra.mxu0 %v609
        %827 = vmatprep.subr.mxu0 0.0
        %828 = vmatpush1.xpose.msra.mxu0 %v612
        %829 = vmatprep.subr.mxu0 0.0
        %830 = vmatpush1.xpose.msra.mxu0 %v615
        %831 = vmatprep.subr.mxu0 0.0
        %832 = vmatpush1.xpose.msra.mxu0 %v618
        %833 = vmatprep.subr.mxu0 0.0
        %834 = vmatpush1.xpose.msra.mxu0 %v621
        %835 = vmatprep.subr.mxu0 0.0
        %836 = vmatpush1.xpose.msra.mxu0 %v624
        %837 = vmatprep.subr.mxu0 0.0
        %838 = vmatpush1.xpose.msra.mxu0 %v627
        %839 = vmatprep.subr.mxu0 0.0
        %840 = vmatpush1.xpose.msra.mxu0 %v630
        %841 = vmatprep.subr.mxu0 0.0
        %842 = vmatpush1.xpose.msra.mxu0 %v633
        %843 = vmatprep.subr.mxu0 0.0
        %844 = vmatpush1.xpose.msra.mxu0 %v636
        %845 = vmatprep.mubr.f32.mxu0 0.0
        %846 = vmatmul.mubr.f32.gmra.mrb[0].mxu0 %v408
        %v847 = vpop.f32.mrb[0].mxu0
        %v848 = vadd.f32 %v344, %v847
        %v849 = vpop.f32.mrb[0].mxu0
        %v850 = vadd.f32 %v344, %v849
        %851 = vmatprep.mubr.f32.mxu0 0.0
        %852 = vmatmul.mubr.f32.gmra.mrb[0].mxu0 %v411
        %v853 = vpop.f32.mrb[0].mxu0
        %v854 = vadd.f32 %v349, %v853
        %v855 = vpop.f32.mrb[0].mxu0
        %v856 = vadd.f32 %v349, %v855
        %857 = vmatprep.mubr.f32.mxu0 0.0
        %858 = vmatmul.mubr.f32.gmra.mrb[0].mxu0 %v414
        %v859 = vpop.f32.mrb[0].mxu0
        %v860 = vadd.f32 %v354, %v859
        %v861 = vpop.f32.mrb[0].mxu0
        %v862 = vadd.f32 %v354, %v861
        %863 = vmatprep.mubr.f32.mxu0 0.0
        %864 = vmatmul.mubr.f32.gmra.mrb[0].mxu0 %v417
        %v865 = vpop.f32.mrb[0].mxu0
        %v866 = vadd.f32 %v359, %v865
        %v867 = vpop.f32.mrb[0].mxu0
        %v868 = vadd.f32 %v359, %v867
        %869 = vmatprep.mubr.f32.mxu0 0.0
        %870 = vmatmul.mubr.f32.gmra.mrb[0].mxu0 %v420
        %v871 = vpop.f32.mrb[0].mxu0
        %v872 = vadd.f32 %v364, %v871
        %v873 = vpop.f32.mrb[0].mxu0
        %v874 = vadd.f32 %v364, %v873
        %875 = vmatprep.mubr.f32.mxu0 0.0
        %876 = vmatmul.mubr.f32.gmra.mrb[0].mxu0 %v423
        %v877 = vpop.f32.mrb[0].mxu0
        %v878 = vadd.f32 %v369, %v877
        %v879 = vpop.f32.mrb[0].mxu0
        %v880 = vadd.f32 %v369, %v879
        %881 = vmatprep.mubr.f32.mxu0 0.0
        %882 = vmatmul.mubr.f32.gmra.mrb[0].mxu0 %v426
        %v883 = vpop.f32.mrb[0].mxu0
        %v884 = vadd.f32 %v374, %v883
        %v885 = vpop.f32.mrb[0].mxu0
        %v886 = vadd.f32 %v374, %v885
        %887 = vmatprep.mubr.f32.mxu0 0.0
        %888 = vmatmul.mubr.f32.gmra.mrb[0].mxu0 %v429
        %v889 = vpop.f32.mrb[0].mxu0
        %v890 = vadd.f32 %v379, %v889
        %v891 = vpop.f32.mrb[0].mxu0
        %v892 = vadd.f32 %v379, %v891
        %893 = vmatprep.mubr.f32.mxu0 0.0
        %894 = vmatmul.mubr.f32.gmra.mrb[0].mxu0 %v432
        %v895 = vpop.f32.mrb[0].mxu0
        %v896 = vadd.f32 %v384, %v895
        %v897 = vpop.f32.mrb[0].mxu0
        %v898 = vadd.f32 %v384, %v897
        %899 = vmatprep.mubr.f32.mxu0 0.0
        %900 = vmatmul.mubr.f32.gmra.mrb[0].mxu0 %v435
        %v901 = vpop.f32.mrb[0].mxu0
        %v902 = vadd.f32 %v389, %v901
        %v903 = vpop.f32.mrb[0].mxu0
        %v904 = vadd.f32 %v389, %v903
        %905 = vmatprep.mubr.f32.mxu0 0.0
        %906 = vmatmul.mubr.f32.gmra.mrb[0].mxu0 %v438
        %v907 = vpop.f32.mrb[0].mxu0
        %v908 = vadd.f32 %v394, %v907
        %v909 = vpop.f32.mrb[0].mxu0
        %v910 = vadd.f32 %v394, %v909
        %911 = vmatprep.mubr.f32.mxu0 0.0
        %912 = vmatmul.mubr.f32.gmra.mrb[0].mxu0 %v441
        %v913 = vpop.f32.mrb[0].mxu0
        %v914 = vadd.f32 %v399, %v913
        %v915 = vpop.f32.mrb[0].mxu0
        %v916 = vadd.f32 %v399, %v915
        %917 = vmatprep.mubr.f32.mxu0 0.0
        %918 = vmatmul.mubr.f32.gmra.mrb[0].mxu0 %v444
        %v919 = vpop.f32.mrb[0].mxu0
        %v920 = vadd.f32 %v404, %v919
        %v921 = vpop.f32.mrb[0].mxu0
        %v922 = vadd.f32 %v404, %v921
        %923 = vdwg.mxu0
        %v924 = vmax.f32 %v705, 0.0
        %v925 = vmax.f32 %v707, 0.0
        %v926 = vmax.f32 %v848, 0.0
        %v927 = vmax.f32 %v850, 0.0
        %v928 = vmax.f32 %v711, 0.0
        %v929 = vmax.f32 %v713, 0.0
        %v930 = vmax.f32 %v854, 0.0
        %v931 = vmax.f32 %v856, 0.0
        %v932 = vmax.f32 %v717, 0.0
        %v933 = vmax.f32 %v719, 0.0
        %v934 = vmax.f32 %v860, 0.0
        %v935 = vmax.f32 %v862, 0.0
        %v936 = vmax.f32 %v723, 0.0
        %v937 = vmax.f32 %v725, 0.0
        %v938 = vmax.f32 %v866, 0.0
        %v939 = vmax.f32 %v868, 0.0
        %v940 = vmax.f32 %v729, 0.0
        %v941 = vmax.f32 %v731, 0.0
        %v942 = vmax.f32 %v872, 0.0
        %v943 = vmax.f32 %v874, 0.0
        %v944 = vmax.f32 %v735, 0.0
        %v945 = vmax.f32 %v737, 0.0
        %v946 = vmax.f32 %v878, 0.0
        %v947 = vmax.f32 %v880, 0.0
        %v948 = vmax.f32 %v741, 0.0
        %v949 = vmax.f32 %v743, 0.0
        %v950 = vmax.f32 %v884, 0.0
        %v951 = vmax.f32 %v886, 0.0
        %v952 = vmax.f32 %v747, 0.0
        %v953 = vmax.f32 %v749, 0.0
        %v954 = vmax.f32 %v890, 0.0
        %v955 = vmax.f32 %v892, 0.0
        %v956 = vmax.f32 %v753, 0.0
        %v957 = vmax.f32 %v755, 0.0
        %v958 = vmax.f32 %v896, 0.0
        %v959 = vmax.f32 %v898, 0.0
        %v960 = vmax.f32 %v759, 0.0
        %v961 = vmax.f32 %v761, 0.0
        %v962 = vmax.f32 %v902, 0.0
        %v963 = vmax.f32 %v904, 0.0
        %v964 = vmax.f32 %v765, 0.0
        %v965 = vmax.f32 %v767, 0.0
        %v966 = vmax.f32 %v908, 0.0
        %v967 = vmax.f32 %v910, 0.0
        %v968 = vmax.f32 %v771, 0.0
        %v969 = vmax.f32 %v773, 0.0
        %v970 = vmax.f32 %v914, 0.0
        %v971 = vmax.f32 %v916, 0.0
        %v972 = vmax.f32 %v777, 0.0
        %v973 = vmax.f32 %v779, 0.0
        %v974 = vmax.f32 %v920, 0.0
        %v975 = vmax.f32 %v922, 0.0
        %v976 = vld [vmem:[%s3] sm:$0xff]
        %vm977 = vcmask 850944
        %v979 = vsel %vm977, %v976, 0
        %981 = vmatprep.subr.mxu0 %v925
        %982 = vmatpush1.msra.mxu0 %v924
        %983 = vmatprep.subr.mxu0 %v929
        %984 = vmatpush1.msra.mxu0 %v928
        %985 = vmatprep.subr.mxu0 %v933
        %986 = vmatpush1.msra.mxu0 %v932
        %987 = vmatprep.subr.mxu0 %v937
        %988 = vmatpush1.msra.mxu0 %v936
        %989 = vmatprep.subr.mxu0 %v941
        %990 = vmatpush1.msra.mxu0 %v940
        %991 = vmatprep.subr.mxu0 %v945
        %992 = vmatpush1.msra.mxu0 %v944
        %993 = vmatprep.subr.mxu0 %v949
        %994 = vmatpush1.msra.mxu0 %v948
        %995 = vmatprep.subr.mxu0 %v953
        %996 = vmatpush1.msra.mxu0 %v952
        %997 = vmatprep.subr.mxu0 %v957
        %998 = vmatpush1.msra.mxu0 %v956
        %999 = vmatprep.subr.mxu0 %v961
        %1000 = vmatpush1.msra.mxu0 %v960
        %1001 = vmatprep.subr.mxu0 %v965
        %1002 = vmatpush1.msra.mxu0 %v964
        %1003 = vmatprep.subr.mxu0 %v969
        %1004 = vmatpush1.msra.mxu0 %v968
        %1005 = vmatprep.subr.mxu0 %v973
        %1006 = vmatpush1.msra.mxu0 %v972
        %1007 = vmatprep.subr.mxu0 0.0
        %1008 = vmatpush1.msra.mxu0 0.0
        %1009 = vmatprep.subr.mxu0 0.0
        %1010 = vmatpush1.msra.mxu0 0.0
        %1011 = vmatprep.subr.mxu0 0.0
        %1012 = vmatpush1.msra.mxu0 0.0
        %1013 = vmatprep.subr.mxu0 0.0
        %1014 = vmatpush1.msra.mxu0 0.0
        %1015 = vmatprep.subr.mxu0 0.0
        %1016 = vmatpush1.msra.mxu0 0.0
        %1017 = vmatprep.subr.mxu0 0.0
        %1018 = vmatpush1.msra.mxu0 0.0
        %1019 = vmatprep.subr.mxu0 0.0
        %1020 = vmatpush1.msra.mxu0 0.0
        %1021 = vmatprep.subr.mxu0 0.0
        %1022 = vmatpush1.msra.mxu0 0.0
        %1023 = vmatprep.subr.mxu0 0.0
        %1024 = vmatpush1.msra.mxu0 0.0
        %1025 = vmatprep.subr.mxu0 0.0
        %1026 = vmatpush1.msra.mxu0 0.0
        %1027 = vmatprep.subr.mxu0 0.0
        %1028 = vmatpush1.msra.mxu0 0.0
        %1029 = vmatprep.subr.mxu0 0.0
        %1030 = vmatpush1.msra.mxu0 0.0
        %1031 = vmatprep.subr.mxu0 0.0
        %1032 = vmatpush1.msra.mxu0 0.0
        %1033 = vmatprep.subr.mxu0 0.0
        %1034 = vmatpush1.msra.mxu0 0.0
        %1035 = vmatprep.subr.mxu0 0.0
        %1036 = vmatpush1.msra.mxu0 0.0
        %1037 = vmatprep.subr.mxu0 0.0
        %1038 = vmatpush1.msra.mxu0 0.0
        %1039 = vmatprep.subr.mxu0 0.0
        %1040 = vmatpush1.msra.mxu0 0.0
        %1041 = vmatprep.subr.mxu0 0.0
        %1042 = vmatpush1.msra.mxu0 0.0
        %1043 = vmatprep.subr.mxu0 0.0
        %1044 = vmatpush1.msra.mxu0 0.0
        %1045 = vmatprep.mubr.f32.mxu0 0.0
        %1046 = vmatmul.mubr.f32.gmra.mrb[0].mxu0 %v979
        %v1047 = vpop.f32.mrb[0].mxu0
        %v1048 = vadd.f32 0.0, %v1047
        %v1049 = vpop.f32.mrb[0].mxu0
        %v1050 = vadd.f32 0.0, %v1049
        %1051 = vdwg.mxu0
        %1052 = vmatprep.subr.mxu0 %v927
        %1053 = vmatpush1.msra.mxu0 %v926
        %1054 = vmatprep.subr.mxu0 %v931
        %1055 = vmatpush1.msra.mxu0 %v930
        %1056 = vmatprep.subr.mxu0 %v935
        %1057 = vmatpush1.msra.mxu0 %v934
        %1058 = vmatprep.subr.mxu0 %v939
        %1059 = vmatpush1.msra.mxu0 %v938
        %1060 = vmatprep.subr.mxu0 %v943
        %1061 = vmatpush1.msra.mxu0 %v942
        %1062 = vmatprep.subr.mxu0 %v947
        %1063 = vmatpush1.msra.mxu0 %v946
        %1064 = vmatprep.subr.mxu0 %v951
        %1065 = vmatpush1.msra.mxu0 %v950
        %1066 = vmatprep.subr.mxu0 %v955
        %1067 = vmatpush1.msra.mxu0 %v954
        %1068 = vmatprep.subr.mxu0 %v959
        %1069 = vmatpush1.msra.mxu0 %v958
        %1070 = vmatprep.subr.mxu0 %v963
        %1071 = vmatpush1.msra.mxu0 %v962
        %1072 = vmatprep.subr.mxu0 %v967
        %1073 = vmatpush1.msra.mxu0 %v966
        %1074 = vmatprep.subr.mxu0 %v971
        %1075 = vmatpush1.msra.mxu0 %v970
        %1076 = vmatprep.subr.mxu0 %v975
        %1077 = vmatpush1.msra.mxu0 %v974
        %1078 = vmatprep.subr.mxu0 0.0
        %1079 = vmatpush1.msra.mxu0 0.0
        %1080 = vmatprep.subr.mxu0 0.0
        %1081 = vmatpush1.msra.mxu0 0.0
        %1082 = vmatprep.subr.mxu0 0.0
        %1083 = vmatpush1.msra.mxu0 0.0
        %1084 = vmatprep.subr.mxu0 0.0
        %1085 = vmatpush1.msra.mxu0 0.0
        %1086 = vmatprep.subr.mxu0 0.0
        %1087 = vmatpush1.msra.mxu0 0.0
        %1088 = vmatprep.subr.mxu0 0.0
        %1089 = vmatpush1.msra.mxu0 0.0
        %1090 = vmatprep.subr.mxu0 0.0
        %1091 = vmatpush1.msra.mxu0 0.0
        %1092 = vmatprep.subr.mxu0 0.0
        %1093 = vmatpush1.msra.mxu0 0.0
        %1094 = vmatprep.subr.mxu0 0.0
        %1095 = vmatpush1.msra.mxu0 0.0
        %1096 = vmatprep.subr.mxu0 0.0
        %1097 = vmatpush1.msra.mxu0 0.0
        %1098 = vmatprep.subr.mxu0 0.0
        %1099 = vmatpush1.msra.mxu0 0.0
        %1100 = vmatprep.subr.mxu0 0.0
        %1101 = vmatpush1.msra.mxu0 0.0
        %1102 = vmatprep.subr.mxu0 0.0
        %1103 = vmatpush1.msra.mxu0 0.0
        %1104 = vmatprep.subr.mxu0 0.0
        %1105 = vmatpush1.msra.mxu0 0.0
        %1106 = vmatprep.subr.mxu0 0.0
        %1107 = vmatpush1.msra.mxu0 0.0
        %1108 = vmatprep.subr.mxu0 0.0
        %1109 = vmatpush1.msra.mxu0 0.0
        %1110 = vmatprep.subr.mxu0 0.0
        %1111 = vmatpush1.msra.mxu0 0.0
        %1112 = vmatprep.subr.mxu0 0.0
        %1113 = vmatpush1.msra.mxu0 0.0
        %1114 = vmatprep.subr.mxu0 0.0
        %1115 = vmatpush1.msra.mxu0 0.0
        %1116 = vmatprep.mubr.f32.mxu0 0.0
        %1117 = vmatmul.mubr.f32.gmra.mrb[0].mxu0 %v979
        %v1118 = vpop.f32.mrb[0].mxu0
        %v1119 = vadd.f32 0.0, %v1118
        %v1120 = vpop.f32.mrb[0].mxu0
        %v1121 = vadd.f32 0.0, %v1120
        %1122 = vdwg.mxu0
        %s1123 = sld [smem:[#allocation2]]
        %v1124 = vstv %s1123
        %v1125 = vadd.f32 %v1048, %v1124
        %v1126 = vadd.f32 %v1050, %v1124
        %v1127 = vadd.f32 %v1119, %v1124
        %v1128 = vadd.f32 %v1121, %v1124
        %v1129 = vmax.f32 %v1125, 0.0
        %v1130 = vmax.f32 %v1126, 0.0
        %v1131 = vmax.f32 %v1127, 0.0
        %v1132 = vmax.f32 %v1128, 0.0
        %v1137 = vcombine.low %v1129, %v1130
        %v1138 = vcombine.low %v1131, %v1132
        %v1140 = vunpack.c.l.s4 1966171168
        %v1141 = vunpack.c.0.s8 %v1140
        %v1142 = vlaneseq
        %v1143 = vshrl.u32 %v1142, 7
        %v1144 = vsub.s32 %v1141, %v1143
        %v1145 = vrot.slane %v1137, %v1144
        %v1147 = vunpack.c.l.s4 1966171168
        %v1148 = vunpack.c.0.s8 %v1147
        %v1149 = vlaneseq
        %v1150 = vshrl.u32 %v1149, 7
        %v1151 = vsub.s32 %v1148, %v1150
        %v1152 = vrot.slane %v1138, %v1151
        %v1153 = vcombine.low %v1145, %v1152
        %v1155 = vunpack.c.l.s4 1966171168
        %v1156 = vunpack.c.0.s8 %v1155
        %v1157 = vlaneseq
        %v1158 = vshrl.u32 %v1157, 7
        %v1159 = vsub.s32 %v1156, %v1158
        %v1160 = vrot.slane %v1153, %v1159
        %v1162 = vlaneseq
        %vm1163 = vcmp.ge.s32.totalorder %v1162, 0
        %vm1164 = vcmp.lt.s32.totalorder %v1162, 512
        %vm1165 = vmand %vm1163, %vm1164
        %1166 = vst.msk [vmem:[%s231] sm:$0xf] %vm1165, %v1160
        %s1167 = sand.u32 %s138, 1
        %s1168 = scalar_lea.sflag [#allocation4], %s1167
        %s1169 = sand.u32 %s138, 1
        %s1170 = smul.addr %s1169, 4
        %s1171 = scalar_lea.vmem [#allocation3], %s1170
        // Predicated region
        $region41: #{net_forward.1} parent=39 // pred_check
          %p1172 = pneg %p148
        $region42: #{net_forward.1} parent=39 // pred_check_branch
          %1174 = sbr.rel (%p1172) target = $region44
        $region43: #{net_forward.1} parent=39 // pred_region
          %s1175 = smul.u32 4, %s20
          %s1176 = ssub.s32 7, %s1175
          %p1177 = scmp.lt.s32.totalorder %s1176, 4
          %s1178 = scalar_select %p1177, %s1176, 4
          %s1179 = smul.u32 16, %s1178
          %s1181 = ssub.s32 64, %s1179
          %1182 = vsyncadd %s1168, %s1181
          %p1183 = scmp.ne.s32.totalorder 0, %s1179
          %s1184 = smul.addr %s1175, 16
          %s1185 = scalar_lea.hbm %s5, %s1184
          %s1186 = sshll.u32 %s1178, 4
          %s1187 = sshll.u32 %s1171, 4
          %s1188 = int_to_ptr.vmem [resolvable:$true] %s1187
          %1190 = dma.vmem_to_hbm [thread:$0]  (%p1183), %s1188, %s1186, %s1185, %s1168
        $region44: #{net_forward.1} parent=39 // pred_fallthru
          _
      $region40: #{net_forward.1} parent=5 // pred_fallthru
        _
      %p1191 = scmp.le.s32.totalorder 2, %s15
      // Predicated region
      $region45: #{net_forward.1} parent=5 // pred_check
        %p1192 = pneg %p1191
      $region46: #{net_forward.1} parent=5 // pred_check_branch
        %1194 = sbr.rel (%p1192) target = $region48
      $region47: #{net_forward.1} parent=5 // pred_region
        %s1195 = ssub.s32 %s15, 2
        // Predicated region
        $region49: #{net_forward.1} parent=47 // pred_check
          %p1196 = pneg %p154
        $region50: #{net_forward.1} parent=47 // pred_check_branch
          %1198 = sbr.rel (%p1196) target = $region52
        $region51: #{net_forward.1} parent=47 // pred_region
          %s1199 = sand.u32 %s139, 1
          %s1200 = scalar_lea.sflag [#allocation4], %s1199
          %s1201 = sand.u32 %s139, 1
          %s1202 = smul.addr %s1201, 4
          %s1203 = scalar_lea.vmem [#allocation3], %s1202
          %1204 = dma.done %s1200, 64
        $region52: #{net_forward.1} parent=47 // pred_fallthru
          _
      $region48: #{net_forward.1} parent=5 // pred_fallthru
        _
    $region6: #{net_forward.1} parent=1 // loop_footer
      %s19 = sadd.s32 1, %s15
    $region7: #{net_forward.1} parent=1 // loop_footer_branch
      %14 = sbr.rel target = $region3
    $region8: #{net_forward.1} parent=1 // loop_exit
      _
    %1205 = vsyncpa [#allocation4], 1
    %s1206 = scalar_lea.sflag [#allocation4], 1
    %1207 = vsyncpa %s1206, 1

</llo_original>
